<compile_context>
chip_gen: v7x
topology: tpu7x:2x2x1
jax: 0.10.0
libtpu: 0.0.40
codegen_flags: <defaults>
</compile_context>

<pallas_src>
import jax
import jax.numpy as jnp
from jax.experimental import pallas as pl
from jax.experimental.pallas import tpu as pltpu


def _round_up(v, m):
    return ((v + m - 1) // m) * m


def _residual_mlp_kernel(x_ref, w1_ref, b1_ref, w2_ref, b2_ref, w3_ref, b3_ref, o_ref):
    """Whole MLP + residual for one tile of batch rows, entirely in VMEM.

    Three bf16 x bf16 -> f32 MXU matmuls; bias add, ReLU and the residual add are f32
    VPU ops.  Works for f32 or bf16 x/out (residual is kept in f32 either way).
    """
    x_in = x_ref[...]                                    # (tm, latent)
    x32 = x_in.astype(jnp.float32)                       # residual term (f32)
    xb = x_in.astype(jnp.bfloat16)                       # MXU input

    h1 = jnp.dot(xb, w1_ref[...], preferred_element_type=jnp.float32) + b1_ref[...]
    h1 = jnp.maximum(h1, 0.0)                            # ReLU (f32)

    h2 = jnp.dot(h1.astype(jnp.bfloat16), w2_ref[...],
                 preferred_element_type=jnp.float32) + b2_ref[...]
    h2 = jnp.maximum(h2, 0.0)                            # ReLU (f32)

    y = jnp.dot(h2.astype(jnp.bfloat16), w3_ref[...],
                preferred_element_type=jnp.float32) + b3_ref[...]

    o_ref[...] = (x32 + y).astype(o_ref.dtype)           # residual add in f32


def _vmem_budget_bytes(tm, latent, hidden, io_itemsize):
    """VMEM footprint estimate for one grid step (feature dims occupy full 128-lane
    tiles in VMEM regardless of logical width; sublanes round to 8)."""
    Lp = _round_up(latent, 128)
    Hp = _round_up(hidden, 128)
    io = 2 * 2 * tm * Lp * io_itemsize                 # x + out tiles, double-buffered
    w = 2 * 2 * (Lp * Hp + Hp * Hp + Hp * Lp)          # bf16 weights, double-buffered
    b = 2 * 4 * 8 * (2 * Hp + Lp)                      # f32 biases (8-sublane rounded)
    inter = 4 * tm * (2 * Hp + 2 * Lp)                 # f32 h1/h2, y, x32 intermediates
    est = io + w + b + inter
    # 1.5x + 4 MiB headroom for compiler-internal scratch / spills; floor 16 MiB, and
    # never above what is safe on every generation (v7x physical VMEM is 64 MiB).
    return int(min(max(1.5 * est + (4 << 20), 16 << 20), 60 << 20))


def prepare_params(w1, b1, w2, b2, w3, b3):
    """One-time parameter prep hoisted out of the forward pass: weights -> bf16 MXU
    inputs, biases -> (1, out) f32.  Call once at init and reuse every step."""
    to_w = lambda w: w.astype(jnp.bfloat16)
    to_b = lambda b: b.reshape(1, -1).astype(jnp.float32)
    return to_w(w1), to_b(b1), to_w(w2), to_b(b2), to_w(w3), to_b(b3)


def residual_mlp(x, w1, b1, w2, b2, w3, b3, *, tm=1024):
    """x: (B, latent) f32 or bf16; w*: (in, out); b*: (1, out) -> (B, latent) in x.dtype.

    Pass parameters through prepare_params() once before the hot loop; raw f32 params
    also work (the bf16 cast is then redone per call).
    """
    B, latent = x.shape
    hidden = w1.shape[1]

    # Row tile: as big as the batch allows (mem-bound regime -> amortize step overhead),
    # but keep >= 2 grid steps when possible so both v7x TensorCores get work.
    Br = _round_up(B, 8)
    tm_eff = min(tm, Br)
    if Br >= 16 and pl.cdiv(B, tm_eff) < 2:
        tm_eff = _round_up(pl.cdiv(Br, 2), 8)
    grid = (pl.cdiv(B, tm_eff),)

    # Dtype plumbing (no-ops when prepare_params() was already applied).
    w1, w2, w3 = (w.astype(jnp.bfloat16) for w in (w1, w2, w3))
    b1, b2, b3 = (b.reshape(1, -1).astype(jnp.float32) for b in (b1, b2, b3))

    # Grid-invariant weights/biases: constant index_map -> fetched once, resident in VMEM
    # across all batch tiles; only the x/out tiles stream from HBM.
    # TODO(synk): add pipeline_mode=pl.Buffered(1) on these resident specs (and tile the
    # hidden/K dim, 256-multiples for the v6e/v7x MXU) once hidden_dim grows enough to
    # press on v7x's 64 MiB VMEM or to flip the kernel MXU-bound.
    resident = lambda shape: pl.BlockSpec(shape, lambda i: (0, 0))

    return pl.pallas_call(
        _residual_mlp_kernel,
        out_shape=jax.ShapeDtypeStruct((B, latent), x.dtype),
        grid_spec=pltpu.PrefetchScalarGridSpec(
            num_scalar_prefetch=0,
            grid=grid,
            in_specs=[
                pl.BlockSpec((tm_eff, latent), lambda i: (i, 0)),  # x tile (streams)
                resident((latent, hidden)),                        # W1 (bf16, resident)
                resident((1, hidden)),                             # b1
                resident((hidden, hidden)),                        # W2
                resident((1, hidden)),                             # b2
                resident((hidden, latent)),                        # W3
                resident((1, latent)),                             # b3
            ],
            out_specs=pl.BlockSpec((tm_eff, latent), lambda i: (i, 0)),
        ),
        compiler_params=pltpu.CompilerParams(
            dimension_semantics=("parallel",),   # batch tiles shard across TCs on v7x
            vmem_limit_bytes=_vmem_budget_bytes(
                tm_eff, latent, hidden, jnp.dtype(x.dtype).itemsize),
        ),
    )(x, w1, b1, w2, b2, w3, b3)


def init_params(key, latent_dim, hidden_dim, dtype=jnp.float32):
    """Deterministic PyTorch-style init: U(-1/sqrt(fan_in), 1/sqrt(fan_in))."""
    ks = jax.random.split(key, 6)

    def lin(kw, kb, fan_in, fan_out):
        bound = 1.0 / jnp.sqrt(jnp.asarray(fan_in, dtype))
        w = jax.random.uniform(kw, (fan_in, fan_out), dtype, -bound, bound)
        b = jax.random.uniform(kb, (1, fan_out), dtype, -bound, bound)
        return w, b

    w1, b1 = lin(ks[0], ks[1], latent_dim, hidden_dim)
    w2, b2 = lin(ks[2], ks[3], hidden_dim, hidden_dim)
    w3, b3 = lin(ks[4], ks[5], hidden_dim, latent_dim)
    return w1, b1, w2, b2, w3, b3


def residual_mlp_ref(x, w1, b1, w2, b2, w3, b3):
    """Pure-JAX f32 reference of the PyTorch forward."""
    h1 = jnp.maximum(x @ w1 + b1, 0.0)
    h2 = jnp.maximum(h1 @ w2 + b2, 0.0)
    return x + (h2 @ w3 + b3)


if __name__ == "__main__":
    latent_dim, hidden_dim = 32, 64
    batch = 8

    key = jax.random.PRNGKey(0)
    k_x, k_p = jax.random.split(key)
    x = jax.random.normal(k_x, (batch, latent_dim), jnp.float32)
    raw_params = init_params(k_p, latent_dim, hidden_dim)
    params = prepare_params(*raw_params)   # one-time weight prep, hoisted out of forward

    out = jax.block_until_ready(residual_mlp(x, *params))
    ref = residual_mlp_ref(x, *raw_params)
    assert out.shape == (batch, latent_dim) and out.dtype == x.dtype
    # bf16 MXU inputs with f32 accumulation -> loosened tolerance vs. the f32 reference.
    assert jnp.allclose(out, ref, atol=5e-2, rtol=5e-2), "mismatch vs. pure-JAX reference"

    # Ragged batch (not a multiple of the row tile): exercises the masked edge block and
    # the >=2-grid-step split (no materialized padding anywhere).
    x2 = jax.random.normal(jax.random.PRNGKey(1), (20, latent_dim), jnp.float32)
    out2 = jax.block_until_ready(residual_mlp(x2, *params))
    ref2 = residual_mlp_ref(x2, *raw_params)
    assert out2.shape == (20, latent_dim)
    assert jnp.allclose(out2, ref2, atol=5e-2, rtol=5e-2), "mismatch on ragged batch"

    # bf16 I/O path (halves streamed HBM bytes in this mem-bound regime).
    xb16 = x.astype(jnp.bfloat16)
    out_b = jax.block_until_ready(residual_mlp(xb16, *params))
    assert out_b.shape == (batch, latent_dim) and out_b.dtype == jnp.bfloat16
    assert jnp.allclose(out_b.astype(jnp.float32), ref, atol=1.5e-1, rtol=1.5e-1), \
        "mismatch on bf16 I/O path"

    print("KERNEL_OK")
</pallas_src>

<mosaic_0001>
module attributes {stable_mosaic.version = 11 : i64} {
  func.func @_residual_mlp_kernel(%arg0: i32, %arg1: memref<8x32xf32, #tpu.memory_space<vmem>>, %arg2: memref<32x64xbf16, #tpu.memory_space<vmem>>, %arg3: memref<1x64xf32, #tpu.memory_space<vmem>>, %arg4: memref<64x64xbf16, #tpu.memory_space<vmem>>, %arg5: memref<1x64xf32, #tpu.memory_space<vmem>>, %arg6: memref<64x32xbf16, #tpu.memory_space<vmem>>, %arg7: memref<1x32xf32, #tpu.memory_space<vmem>>, %arg8: memref<8x32xf32, #tpu.memory_space<vmem>>) attributes {dimension_semantics = [#tpu.dimension_semantics<parallel>], iteration_bounds = array<i64: 1>, scalar_prefetch = 0 : i64, scratch_operands = 0 : i64, tpu.core_type = #tpu.core_type<tc>, window_params = [{transform_indices = @transform_0, window_bounds = array<i64: 8, 32>}, {pipeline_mode = #tpu.pipeline_mode<synchronous>, transform_indices = @transform_1, window_bounds = array<i64: 32, 64>}, {pipeline_mode = #tpu.pipeline_mode<synchronous>, transform_indices = @transform_2, window_bounds = array<i64: 1, 64>}, {pipeline_mode = #tpu.pipeline_mode<synchronous>, transform_indices = @transform_3, window_bounds = array<i64: 64, 64>}, {pipeline_mode = #tpu.pipeline_mode<synchronous>, transform_indices = @transform_4, window_bounds = array<i64: 1, 64>}, {pipeline_mode = #tpu.pipeline_mode<synchronous>, transform_indices = @transform_5, window_bounds = array<i64: 64, 32>}, {pipeline_mode = #tpu.pipeline_mode<synchronous>, transform_indices = @transform_6, window_bounds = array<i64: 1, 32>}, {transform_indices = @transform_7, window_bounds = array<i64: 8, 32>}]} {
    %c0 = arith.constant 0 : index
    %c0_0 = arith.constant 0 : index
    %0 = vector.load %arg1[%c0, %c0_0] : memref<8x32xf32, #tpu.memory_space<vmem>>, vector<8x32xf32>
    %1 = arith.truncf %0 : vector<8x32xf32> to vector<8x32xbf16>
    %c0_1 = arith.constant 0 : index
    %c0_2 = arith.constant 0 : index
    %2 = vector.load %arg2[%c0_1, %c0_2] : memref<32x64xbf16, #tpu.memory_space<vmem>>, vector<32x64xbf16>
    %cst = arith.constant dense<0.000000e+00> : vector<8x64xf32>
    %3 = tpu.matmul %1, %2, %cst {dimension_numbers = #tpu.dot_dimension_numbers<[1], [0], [0], [1], [0, 0, 1, 1], [], []>} : vector<8x32xbf16>, vector<32x64xbf16>, vector<8x64xf32> -> vector<8x64xf32>
    %c0_3 = arith.constant 0 : index
    %c0_4 = arith.constant 0 : index
    %4 = vector.load %arg3[%c0_3, %c0_4] : memref<1x64xf32, #tpu.memory_space<vmem>>, vector<1x64xf32>
    %5 = vector.broadcast %4 : vector<1x64xf32> to vector<8x64xf32>
    %6 = arith.addf %3, %5 : vector<8x64xf32>
    %cst_5 = arith.constant 0.000000e+00 : f32
    %7 = vector.broadcast %cst_5 : f32 to vector<8x64xf32>
    %8 = arith.maximumf %6, %7 : vector<8x64xf32>
    %9 = arith.truncf %8 : vector<8x64xf32> to vector<8x64xbf16>
    %c0_6 = arith.constant 0 : index
    %c0_7 = arith.constant 0 : index
    %10 = vector.load %arg4[%c0_6, %c0_7] : memref<64x64xbf16, #tpu.memory_space<vmem>>, vector<64x64xbf16>
    %cst_8 = arith.constant dense<0.000000e+00> : vector<8x64xf32>
    %11 = tpu.matmul %9, %10, %cst_8 {dimension_numbers = #tpu.dot_dimension_numbers<[1], [0], [0], [1], [0, 0, 1, 1], [], []>} : vector<8x64xbf16>, vector<64x64xbf16>, vector<8x64xf32> -> vector<8x64xf32>
    %c0_9 = arith.constant 0 : index
    %c0_10 = arith.constant 0 : index
    %12 = vector.load %arg5[%c0_9, %c0_10] : memref<1x64xf32, #tpu.memory_space<vmem>>, vector<1x64xf32>
    %13 = vector.broadcast %12 : vector<1x64xf32> to vector<8x64xf32>
    %14 = arith.addf %11, %13 : vector<8x64xf32>
    %cst_11 = arith.constant 0.000000e+00 : f32
    %15 = vector.broadcast %cst_11 : f32 to vector<8x64xf32>
    %16 = arith.maximumf %14, %15 : vector<8x64xf32>
    %17 = arith.truncf %16 : vector<8x64xf32> to vector<8x64xbf16>
    %c0_12 = arith.constant 0 : index
    %c0_13 = arith.constant 0 : index
    %18 = vector.load %arg6[%c0_12, %c0_13] : memref<64x32xbf16, #tpu.memory_space<vmem>>, vector<64x32xbf16>
    %cst_14 = arith.constant dense<0.000000e+00> : vector<8x32xf32>
    %19 = tpu.matmul %17, %18, %cst_14 {dimension_numbers = #tpu.dot_dimension_numbers<[1], [0], [0], [1], [0, 0, 1, 1], [], []>} : vector<8x64xbf16>, vector<64x32xbf16>, vector<8x32xf32> -> vector<8x32xf32>
    %c0_15 = arith.constant 0 : index
    %c0_16 = arith.constant 0 : index
    %20 = vector.load %arg7[%c0_15, %c0_16] : memref<1x32xf32, #tpu.memory_space<vmem>>, vector<1x32xf32>
    %21 = vector.broadcast %20 : vector<1x32xf32> to vector<8x32xf32>
    %22 = arith.addf %19, %21 : vector<8x32xf32>
    %23 = arith.addf %0, %22 : vector<8x32xf32>
    %c0_17 = arith.constant 0 : index
    %c0_18 = arith.constant 0 : index
    %24 = vector.load %arg8[%c0_17, %c0_18] : memref<8x32xf32, #tpu.memory_space<vmem>>, vector<8x32xf32>
    tpu.vector_store %arg8[%c0_17, %c0_18], %23 {strides = array<i32>} : memref<8x32xf32, #tpu.memory_space<vmem>>, vector<8x32xf32>,
    return
  }
  func.func @transform_0(%arg0: i32) -> (i32, i32) {
    %c0_i32 = arith.constant 0 : i32
    %c0_i32_0 = arith.constant 0 : i32
    return %arg0, %c0_i32 : i32, i32
  }
  func.func @transform_1(%arg0: i32) -> (i32, i32) {
    %c0_i32 = arith.constant 0 : i32
    %c0_i32_0 = arith.constant 0 : i32
    %c0_i32_1 = arith.constant 0 : i32
    return %c0_i32, %c0_i32_0 : i32, i32
  }
  func.func @transform_2(%arg0: i32) -> (i32, i32) {
    %c0_i32 = arith.constant 0 : i32
    %c0_i32_0 = arith.constant 0 : i32
    %c0_i32_1 = arith.constant 0 : i32
    return %c0_i32, %c0_i32_0 : i32, i32
  }
  func.func @transform_3(%arg0: i32) -> (i32, i32) {
    %c0_i32 = arith.constant 0 : i32
    %c0_i32_0 = arith.constant 0 : i32
    %c0_i32_1 = arith.constant 0 : i32
    return %c0_i32, %c0_i32_0 : i32, i32
  }
  func.func @transform_4(%arg0: i32) -> (i32, i32) {
    %c0_i32 = arith.constant 0 : i32
    %c0_i32_0 = arith.constant 0 : i32
    %c0_i32_1 = arith.constant 0 : i32
    return %c0_i32, %c0_i32_0 : i32, i32
  }
  func.func @transform_5(%arg0: i32) -> (i32, i32) {
    %c0_i32 = arith.constant 0 : i32
    %c0_i32_0 = arith.constant 0 : i32
    %c0_i32_1 = arith.constant 0 : i32
    return %c0_i32, %c0_i32_0 : i32, i32
  }
  func.func @transform_6(%arg0: i32) -> (i32, i32) {
    %c0_i32 = arith.constant 0 : i32
    %c0_i32_0 = arith.constant 0 : i32
    %c0_i32_1 = arith.constant 0 : i32
    return %c0_i32, %c0_i32_0 : i32, i32
  }
  func.func @transform_7(%arg0: i32) -> (i32, i32) {
    %c0_i32 = arith.constant 0 : i32
    %c0_i32_0 = arith.constant 0 : i32
    return %arg0, %c0_i32 : i32, i32
  }
}

</mosaic_0001>

<llo_original>
// kernel: tpu_custom_call.1
$region0: #{tpu_custom_call.1}
  #allocation0 [shape = 'u32[]', space=smem, size = 0x4, offset = 0x4, fixed_abs, tag = 'smem constant byte address 0x4 - core index']
  #allocation1 [shape = 'u32[144,128]{1,0:T(1,128)}', space=vmem, size = 0x12000, scoped, tag = 'internal scratch']
  %s0 = inlined_call_operand.hbm [shape: f32[8,32], index: 0, kind: input, shape index: {}]
  %s1 = inlined_call_operand.vmem [shape: bf16[32,64], index: 1, kind: input, shape index: {}]
  %s2 = inlined_call_operand.vmem [shape: f32[1,64], index: 2, kind: input, shape index: {}]
  %s3 = inlined_call_operand.vmem [shape: bf16[64,64], index: 3, kind: input, shape index: {}]
  %s4 = inlined_call_operand.vmem [shape: f32[1,64], index: 4, kind: input, shape index: {}]
  %s5 = inlined_call_operand.vmem [shape: bf16[64,32], index: 5, kind: input, shape index: {}]
  %s6 = inlined_call_operand.vmem [shape: f32[1,32], index: 6, kind: input, shape index: {}]
  %s7 = inlined_call_operand.hbm [shape: f32[8,32], index: 7, kind: output, shape index: {}]
  %s8 = sld [smem:[#allocation0]]
  $region42: #{tpu_custom_call.1} parent=0
    _
  %s10 = ssub.s32 1, %s8
  %s11 = scalar_select 0, %s10, %s8
  $region1: #{tpu_custom_call.1} parent=0
    #allocation2 [shape = 'u8[4096]{0}', space=vmem, size = 0x1000, scoped, tag = 'input window, operand 0, single buffered']
    #allocation3 [shape = 's32[1]{0}', space=sflag, size = 0x4, scoped, tag = 'scoped memory for tpu_custom_call.1']
    #allocation4 [shape = 's32[1]{0}', space=sflag, size = 0x4, scoped, tag = 'scoped memory for tpu_custom_call.1']
    #allocation5 [shape = 'u8[4096]{0}', space=vmem, size = 0x1000, scoped, tag = 'output window, operand 0, single buffered']
    %12 = vsyncpa [#allocation3], 0
    %13 = vsyncpa [#allocation4], 0
    // Predicated region
    $region2: #{tpu_custom_call.1} parent=1 // pred_check
      _
    $region3: #{tpu_custom_call.1} parent=1 // pred_check_branch
      %15 = sbr.rel (0) target = $region5
    $region4: #{tpu_custom_call.1} parent=1 // pred_region
      %s17 = ssub.s32 128, 128
      %18 = vsyncadd [#allocation3], %s17
      %s20 = sshll.u32 [#allocation2], 4
      %s21 = int_to_ptr.vmem [resolvable:$true] %s20
      %23 = dma.hbm_to_vmem [thread:$0]  %s0, 128, %s21, [#allocation3]
    $region5: #{tpu_custom_call.1} parent=1 // pred_fallthru
      _
    // Predicated region
    $region6: #{tpu_custom_call.1} parent=1 // pred_check
      _
    $region7: #{tpu_custom_call.1} parent=1 // pred_check_branch
      %25 = sbr.rel (0) target = $region9
    $region8: #{tpu_custom_call.1} parent=1 // pred_region
      _
    $region9: #{tpu_custom_call.1} parent=1 // pred_fallthru
      _
    // Predicated region
    $region10: #{tpu_custom_call.1} parent=1 // pred_check
      _
    $region11: #{tpu_custom_call.1} parent=1 // pred_check_branch
      %27 = sbr.rel (0) target = $region13
    $region12: #{tpu_custom_call.1} parent=1 // pred_region
      _
    $region13: #{tpu_custom_call.1} parent=1 // pred_fallthru
      _
    // Predicated region
    $region14: #{tpu_custom_call.1} parent=1 // pred_check
      _
    $region15: #{tpu_custom_call.1} parent=1 // pred_check_branch
      %29 = sbr.rel (0) target = $region17
    $region16: #{tpu_custom_call.1} parent=1 // pred_region
      _
    $region17: #{tpu_custom_call.1} parent=1 // pred_fallthru
      _
    // Predicated region
    $region18: #{tpu_custom_call.1} parent=1 // pred_check
      _
    $region19: #{tpu_custom_call.1} parent=1 // pred_check_branch
      %31 = sbr.rel (0) target = $region21
    $region20: #{tpu_custom_call.1} parent=1 // pred_region
      _
    $region21: #{tpu_custom_call.1} parent=1 // pred_fallthru
      _
    // Predicated region
    $region22: #{tpu_custom_call.1} parent=1 // pred_check
      _
    $region23: #{tpu_custom_call.1} parent=1 // pred_check_branch
      %33 = sbr.rel (0) target = $region25
    $region24: #{tpu_custom_call.1} parent=1 // pred_region
      _
    $region25: #{tpu_custom_call.1} parent=1 // pred_fallthru
      _
    // Predicated region
    $region26: #{tpu_custom_call.1} parent=1 // pred_check
      _
    $region27: #{tpu_custom_call.1} parent=1 // pred_check_branch
      %35 = sbr.rel (0) target = $region29
    $region28: #{tpu_custom_call.1} parent=1 // pred_region
      _
    $region29: #{tpu_custom_call.1} parent=1 // pred_fallthru
      _
    // Predicated region
    $region30: #{tpu_custom_call.1} parent=1 // pred_check
      _
    $region31: #{tpu_custom_call.1} parent=1 // pred_check_branch
      %37 = sbr.rel (0) target = $region33
    $region32: #{tpu_custom_call.1} parent=1 // pred_region
      %38 = dma.done [#allocation3], 128
    $region33: #{tpu_custom_call.1} parent=1 // pred_fallthru
      _
    %v40 = vld [vmem:[#allocation2] sm:$0xff]
    %v41 = vpack.c.bf16 %v40, %v40
    %v42 = vld [vmem:[%s1] sm:$0xf]
    %v43 = vld [vmem:[%s1 + $0x4] sm:$0xf]
    %v44 = vld [vmem:[%s1 + $0x8] sm:$0xf]
    %v45 = vld [vmem:[%s1 + $0xc] sm:$0xf]
    %v46 = vld [vmem:[%s2] sm:$0x1]
    %v48 = vlaneseq
    %v49 = vshrl.u32 %v48, 7
    %v50 = vsub.s32 0, %v49
    %v51 = vrot.slane %v46, %v50
    %v57 = vunpack.c.l.b16 %v42
    %v58 = vunpack.c.l.b16 %v43
    %v59 = vunpack.c.l.b16 %v44
    %v60 = vunpack.c.l.b16 %v45
    %v61 = vpack.c.b16 %v58, %v57
    %v62 = vpack.c.b16 %v60, %v59
    %vm65 = vcmask 261120
    %v67 = vsel %vm65, %v41, 0
    %69 = vmatprep.subr.bf16.mxu0 0
    %70 = vmatpush1.bf16.msra.mxu0 %v61
    %71 = vmatprep.subr.bf16.mxu0 0
    %72 = vmatpush1.bf16.msra.mxu0 %v62
    %73 = vmatprep.subr.bf16.mxu0 0
    %74 = vmatpush1.bf16.msra.mxu0 0
    %75 = vmatprep.subr.bf16.mxu0 0
    %76 = vmatpush1.bf16.msra.mxu0 0
    %77 = vmatprep.subr.bf16.mxu0 0
    %78 = vmatpush1.bf16.msra.mxu0 0
    %79 = vmatprep.subr.bf16.mxu0 0
    %80 = vmatpush1.bf16.msra.mxu0 0
    %81 = vmatprep.subr.bf16.mxu0 0
    %82 = vmatpush1.bf16.msra.mxu0 0
    %83 = vmatprep.subr.bf16.mxu0 0
    %84 = vmatpush1.bf16.msra.mxu0 0
    %85 = vmatprep.subr.bf16.mxu0 0
    %86 = vmatpush1.bf16.msra.mxu0 0
    %87 = vmatprep.subr.bf16.mxu0 0
    %88 = vmatpush1.bf16.msra.mxu0 0
    %89 = vmatprep.subr.bf16.mxu0 0
    %90 = vmatpush1.bf16.msra.mxu0 0
    %91 = vmatprep.subr.bf16.mxu0 0
    %92 = vmatpush1.bf16.msra.mxu0 0
    %93 = vmatprep.subr.bf16.mxu0 0
    %94 = vmatpush1.bf16.msra.mxu0 0
    %95 = vmatprep.subr.bf16.mxu0 0
    %96 = vmatpush1.bf16.msra.mxu0 0
    %97 = vmatprep.subr.bf16.mxu0 0
    %98 = vmatpush1.bf16.msra.mxu0 0
    %99 = vmatprep.subr.bf16.mxu0 0
    %100 = vmatpush1.bf16.msra.mxu0 0
    %101 = vmatprep.mubr.bf16.mxu0 0
    %102 = vmatmul.mubr.bf16.gmra.mrb[0].mxu0 %v67
    %v103 = vpop.f32.mrb[0].mxu0
    %v104 = vadd.f32 %v51, %v103
    %v105 = vpop.f32.mrb[0].mxu0
    %v106 = vpop.f32.mrb[0].mxu0
    %v107 = vpop.f32.mrb[0].mxu0
    %108 = vdwg.mxu0
    %v109 = vmax.f32 %v104, 0.0
    %v110 = vpack.c.bf16 %v109, %v109
    %v111 = vld [vmem:[%s3] sm:$0xf]
    %v112 = vld [vmem:[%s3 + $0x4] sm:$0xf]
    %v113 = vld [vmem:[%s3 + $0x8] sm:$0xf]
    %v114 = vld [vmem:[%s3 + $0xc] sm:$0xf]
    %v115 = vld [vmem:[%s3 + $0x10] sm:$0xf]
    %v116 = vld [vmem:[%s3 + $0x14] sm:$0xf]
    %v117 = vld [vmem:[%s3 + $0x18] sm:$0xf]
    %v118 = vld [vmem:[%s3 + $0x1c] sm:$0xf]
    %v119 = vld [vmem:[%s4] sm:$0x1]
    %v121 = vlaneseq
    %v122 = vshrl.u32 %v121, 7
    %v123 = vsub.s32 0, %v122
    %v124 = vrot.slane %v119, %v123
    %v134 = vunpack.c.l.b16 %v111
    %v135 = vunpack.c.l.b16 %v112
    %v136 = vunpack.c.l.b16 %v113
    %v137 = vunpack.c.l.b16 %v114
    %v138 = vunpack.c.l.b16 %v115
    %v139 = vunpack.c.l.b16 %v116
    %v140 = vunpack.c.l.b16 %v117
    %v141 = vunpack.c.l.b16 %v118
    %v142 = vpack.c.b16 %v135, %v134
    %v143 = vpack.c.b16 %v137, %v136
    %v144 = vpack.c.b16 %v139, %v138
    %v145 = vpack.c.b16 %v141, %v140
    %vm150 = vcmask 523264
    %v152 = vsel %vm150, %v110, 0
    %154 = vmatprep.subr.bf16.mxu0 0
    %155 = vmatpush1.bf16.msra.mxu0 %v142
    %156 = vmatprep.subr.bf16.mxu0 0
    %157 = vmatpush1.bf16.msra.mxu0 %v143
    %158 = vmatprep.subr.bf16.mxu0 0
    %159 = vmatpush1.bf16.msra.mxu0 %v144
    %160 = vmatprep.subr.bf16.mxu0 0
    %161 = vmatpush1.bf16.msra.mxu0 %v145
    %162 = vmatprep.subr.bf16.mxu0 0
    %163 = vmatpush1.bf16.msra.mxu0 0
    %164 = vmatprep.subr.bf16.mxu0 0
    %165 = vmatpush1.bf16.msra.mxu0 0
    %166 = vmatprep.subr.bf16.mxu0 0
    %167 = vmatpush1.bf16.msra.mxu0 0
    %168 = vmatprep.subr.bf16.mxu0 0
    %169 = vmatpush1.bf16.msra.mxu0 0
    %170 = vmatprep.subr.bf16.mxu0 0
    %171 = vmatpush1.bf16.msra.mxu0 0
    %172 = vmatprep.subr.bf16.mxu0 0
    %173 = vmatpush1.bf16.msra.mxu0 0
    %174 = vmatprep.subr.bf16.mxu0 0
    %175 = vmatpush1.bf16.msra.mxu0 0
    %176 = vmatprep.subr.bf16.mxu0 0
    %177 = vmatpush1.bf16.msra.mxu0 0
    %178 = vmatprep.subr.bf16.mxu0 0
    %179 = vmatpush1.bf16.msra.mxu0 0
    %180 = vmatprep.subr.bf16.mxu0 0
    %181 = vmatpush1.bf16.msra.mxu0 0
    %182 = vmatprep.subr.bf16.mxu0 0
    %183 = vmatpush1.bf16.msra.mxu0 0
    %184 = vmatprep.subr.bf16.mxu0 0
    %185 = vmatpush1.bf16.msra.mxu0 0
    %186 = vmatprep.mubr.bf16.mxu0 0
    %187 = vmatmul.mubr.bf16.gmra.mrb[0].mxu0 %v152
    %v188 = vpop.f32.mrb[0].mxu0
    %v189 = vadd.f32 %v124, %v188
    %v190 = vpop.f32.mrb[0].mxu0
    %v191 = vpop.f32.mrb[0].mxu0
    %v192 = vpop.f32.mrb[0].mxu0
    %193 = vdwg.mxu0
    %v194 = vmax.f32 %v189, 0.0
    %v195 = vpack.c.bf16 %v194, %v194
    %v196 = vld [vmem:[%s5] sm:$0xf]
    %v197 = vld [vmem:[%s5 + $0x4] sm:$0xf]
    %v198 = vld [vmem:[%s5 + $0x8] sm:$0xf]
    %v199 = vld [vmem:[%s5 + $0xc] sm:$0xf]
    %v200 = vld [vmem:[%s5 + $0x10] sm:$0xf]
    %v201 = vld [vmem:[%s5 + $0x14] sm:$0xf]
    %v202 = vld [vmem:[%s5 + $0x18] sm:$0xf]
    %v203 = vld [vmem:[%s5 + $0x1c] sm:$0xf]
    %v204 = vld [vmem:[%s6] sm:$0x1]
    %v206 = vlaneseq
    %v207 = vshrl.u32 %v206, 7
    %v208 = vsub.s32 0, %v207
    %v209 = vrot.slane %v204, %v208
    %v219 = vunpack.c.l.b16 %v196
    %v220 = vunpack.c.l.b16 %v197
    %v221 = vunpack.c.l.b16 %v198
    %v222 = vunpack.c.l.b16 %v199
    %v223 = vunpack.c.l.b16 %v200
    %v224 = vunpack.c.l.b16 %v201
    %v225 = vunpack.c.l.b16 %v202
    %v226 = vunpack.c.l.b16 %v203
    %v227 = vpack.c.b16 %v220, %v219
    %v228 = vpack.c.b16 %v222, %v221
    %v229 = vpack.c.b16 %v224, %v223
    %v230 = vpack.c.b16 %v226, %v225
    %v236 = vsel %vm150, %v195, 0
    %238 = vmatprep.subr.bf16.mxu0 0
    %239 = vmatpush1.bf16.msra.mxu0 %v227
    %240 = vmatprep.subr.bf16.mxu0 0
    %241 = vmatpush1.bf16.msra.mxu0 %v228
    %242 = vmatprep.subr.bf16.mxu0 0
    %243 = vmatpush1.bf16.msra.mxu0 %v229
    %244 = vmatprep.subr.bf16.mxu0 0
    %245 = vmatpush1.bf16.msra.mxu0 %v230
    %246 = vmatprep.subr.bf16.mxu0 0
    %247 = vmatpush1.bf16.msra.mxu0 0
    %248 = vmatprep.subr.bf16.mxu0 0
    %249 = vmatpush1.bf16.msra.mxu0 0
    %250 = vmatprep.subr.bf16.mxu0 0
    %251 = vmatpush1.bf16.msra.mxu0 0
    %252 = vmatprep.subr.bf16.mxu0 0
    %253 = vmatpush1.bf16.msra.mxu0 0
    %254 = vmatprep.subr.bf16.mxu0 0
    %255 = vmatpush1.bf16.msra.mxu0 0
    %256 = vmatprep.subr.bf16.mxu0 0
    %257 = vmatpush1.bf16.msra.mxu0 0
    %258 = vmatprep.subr.bf16.mxu0 0
    %259 = vmatpush1.bf16.msra.mxu0 0
    %260 = vmatprep.subr.bf16.mxu0 0
    %261 = vmatpush1.bf16.msra.mxu0 0
    %262 = vmatprep.subr.bf16.mxu0 0
    %263 = vmatpush1.bf16.msra.mxu0 0
    %264 = vmatprep.subr.bf16.mxu0 0
    %265 = vmatpush1.bf16.msra.mxu0 0
    %266 = vmatprep.subr.bf16.mxu0 0
    %267 = vmatpush1.bf16.msra.mxu0 0
    %268 = vmatprep.subr.bf16.mxu0 0
    %269 = vmatpush1.bf16.msra.mxu0 0
    %270 = vmatprep.mubr.bf16.mxu0 0
    %271 = vmatmul.mubr.bf16.gmra.mrb[0].mxu0 %v236
    %v272 = vpop.f32.mrb[0].mxu0
    %v273 = vadd.f32 %v209, %v272
    %v274 = vpop.f32.mrb[0].mxu0
    %v275 = vpop.f32.mrb[0].mxu0
    %v276 = vpop.f32.mrb[0].mxu0
    %277 = vdwg.mxu0
    %v278 = vadd.f32 %v40, %v273
    %279 = vst.msk [vmem:[#allocation5] sm:$0xff] %vm65, %v278
    // Predicated region
    $region34: #{tpu_custom_call.1} parent=1 // pred_check
      _
    $region35: #{tpu_custom_call.1} parent=1 // pred_check_branch
      %281 = sbr.rel (0) target = $region37
    $region36: #{tpu_custom_call.1} parent=1 // pred_region
      %s283 = ssub.s32 128, 128
      %284 = vsyncadd [#allocation4], %s283
      %s286 = sshll.u32 [#allocation5], 4
      %s287 = int_to_ptr.vmem [resolvable:$true] %s286
      %289 = dma.vmem_to_hbm [thread:$0]  %s287, 128, %s7, [#allocation4]
    $region37: #{tpu_custom_call.1} parent=1 // pred_fallthru
      _
    // Predicated region
    $region38: #{tpu_custom_call.1} parent=1 // pred_check
      _
    $region39: #{tpu_custom_call.1} parent=1 // pred_check_branch
      %291 = sbr.rel (0) target = $region41
    $region40: #{tpu_custom_call.1} parent=1 // pred_region
      %292 = dma.done [#allocation4], 128
    $region41: #{tpu_custom_call.1} parent=1 // pred_fallthru
      _
    %293 = vsyncpa [#allocation3], 1
    %294 = vsyncpa [#allocation4], 1

</llo_original>
